<compile_context>
chip_gen: v7x
topology: tpu7x:2x2x1
jax: 0.10.0
libtpu: 0.0.40
codegen_flags: <defaults>
</compile_context>

<pallas_src>
import jax
import jax.numpy as jnp
from jax.experimental import pallas as pl
from jax.experimental.pallas import tpu as pltpu


def _identity_kernel(x_ref, o_ref):
    # Pure pass-through of the current (rows_tile, cols) lane-dense slab.
    o_ref[...] = x_ref[...]


def global_context_passthrough(x, *, vmem_block_bytes=8 * 1024 * 1024):
    """Identity copy of the global-context tensor.

    Debug/demo helper only — NOT called from forward().  Flattens
    [B, S, L, H] -> [B*S, L*H] so blocks are lane-dense (last dim a large
    multiple of 128) and tiles coarsely over rows so DMA setup / per-step
    pipeline overhead is amortized (approaches the HBM copy roofline).
    """
    B, S, L, H = x.shape
    rows, cols = B * S, L * H
    x2 = x.reshape(rows, cols)

    # Pick the largest row tile that fits the per-block VMEM budget.
    # (Pipeline double-buffers input + output, so real usage ~4x block bytes;
    #  the budget below leaves ample headroom even on v7x's 64 MiB VMEM.)
    bytes_per_row = cols * x2.dtype.itemsize
    max_rows = max(1, vmem_block_bytes // max(1, bytes_per_row))
    if max_rows >= rows:
        tile_rows = rows                      # single block, full extent
    else:
        tile_rows = max(8, (max_rows // 8) * 8)
        # Keep the grid exact (evenly dividing) — simplest correct tiling.
        while tile_rows > 8 and rows % tile_rows != 0:
            tile_rows -= 8
        if rows % tile_rows != 0:
            tile_rows = rows                  # fallback: one full-extent block

    grid = (rows // tile_rows,)
    spec = pl.BlockSpec((tile_rows, cols), lambda i: (i, 0))

    y2 = pl.pallas_call(
        _identity_kernel,
        out_shape=jax.ShapeDtypeStruct((rows, cols), x2.dtype),
        grid=grid,
        in_specs=[spec],
        out_specs=spec,
        compiler_params=pltpu.CompilerParams(
            dimension_semantics=("arbitrary",),
            vmem_limit_bytes=64 * 1024 * 1024,
        ),
    )(x2)
    return y2.reshape(B, S, L, H)


class GlobalContext:
    """JAX/Pallas port of the (stub) PyTorch GlobalContext module."""

    def __init__(self, global_context_seqs_per_doc):
        # No learnable parameters in the reference __init__.
        self.global_context_seqs_per_doc = global_context_seqs_per_doc

    def forward(self, inputs):
        # TODO(synk): reference forward is `pass` (returns None) — there is no
        # compute to translate, so no kernel is launched here (zero HBM traffic).
        return None

    __call__ = forward


if __name__ == "__main__":
    key = jax.random.PRNGKey(0)

    batch = 2
    global_context_seqs_per_doc = 3
    seq_len = 8
    hidden = 128  # lane-friendly last dim

    x = jax.random.normal(
        key, (batch, global_context_seqs_per_doc, seq_len, hidden), dtype=jnp.float32
    )

    # Exercise the Pallas identity kernel (demo/debug path) and verify it.
    y = global_context_passthrough(x)
    y = jax.block_until_ready(y)
    assert y.shape == x.shape and y.dtype == x.dtype
    assert bool(jnp.array_equal(y, x))

    # Exercise the module wrapper (matches reference semantics: returns None,
    # performs no computation).
    module = GlobalContext(global_context_seqs_per_doc)
    out = module(x)
    assert out is None

    print("KERNEL_OK")
</pallas_src>

<mosaic_0001>
module attributes {stable_mosaic.version = 11 : i64} {
  func.func @_identity_kernel(%arg0: i32, %arg1: memref<6x1024xf32, #tpu.memory_space<vmem>>, %arg2: memref<6x1024xf32, #tpu.memory_space<vmem>>) attributes {dimension_semantics = [#tpu.dimension_semantics<arbitrary>], iteration_bounds = array<i64: 1>, scalar_prefetch = 0 : i64, scratch_operands = 0 : i64, tpu.core_type = #tpu.core_type<tc>, window_params = [{transform_indices = @transform_0, window_bounds = array<i64: 6, 1024>}, {transform_indices = @transform_1, window_bounds = array<i64: 6, 1024>}]} {
    %c0 = arith.constant 0 : index
    %c0_0 = arith.constant 0 : index
    %0 = vector.load %arg1[%c0, %c0_0] : memref<6x1024xf32, #tpu.memory_space<vmem>>, vector<6x1024xf32>
    %c0_1 = arith.constant 0 : index
    %c0_2 = arith.constant 0 : index
    %1 = vector.load %arg2[%c0_1, %c0_2] : memref<6x1024xf32, #tpu.memory_space<vmem>>, vector<6x1024xf32>
    tpu.vector_store %arg2[%c0_1, %c0_2], %0 {strides = array<i32>} : memref<6x1024xf32, #tpu.memory_space<vmem>>, vector<6x1024xf32>,
    return
  }
  func.func @transform_0(%arg0: i32) -> (i32, i32) {
    %c0_i32 = arith.constant 0 : i32
    %c0_i32_0 = arith.constant 0 : i32
    return %arg0, %c0_i32 : i32, i32
  }
  func.func @transform_1(%arg0: i32) -> (i32, i32) {
    %c0_i32 = arith.constant 0 : i32
    %c0_i32_0 = arith.constant 0 : i32
    return %arg0, %c0_i32 : i32, i32
  }
}

</mosaic_0001>

<llo_original>
// kernel: tpu_custom_call.1
$region0: #{tpu_custom_call.1}
  #allocation0 [shape = 'u32[]', space=smem, size = 0x4, offset = 0x4, fixed_abs, tag = 'smem constant byte address 0x4 - core index']
  #allocation1 [shape = 'u32[144,128]{1,0:T(1,128)}', space=vmem, size = 0x12000, scoped, tag = 'internal scratch']
  %s0 = inlined_call_operand.hbm [shape: f32[6,1024], index: 0, kind: input, shape index: {}]
  %s1 = inlined_call_operand.hbm [shape: f32[6,1024], index: 1, kind: output, shape index: {}]
  %s2 = sld [smem:[#allocation0]]
  $region18: #{tpu_custom_call.1} parent=0
    _
  %s4 = ssub.s32 1, %s2
  %s5 = scalar_select 0, %s4, %s2
  $region1: #{tpu_custom_call.1} parent=0
    #allocation2 [shape = 'u8[32768]{0}', space=vmem, size = 0x8000, scoped, tag = 'input window, operand 0, single buffered']
    #allocation3 [shape = 's32[1]{0}', space=sflag, size = 0x4, scoped, tag = 'scoped memory for tpu_custom_call.1']
    #allocation4 [shape = 's32[1]{0}', space=sflag, size = 0x4, scoped, tag = 'scoped memory for tpu_custom_call.1']
    #allocation5 [shape = 'u8[32768]{0}', space=vmem, size = 0x8000, scoped, tag = 'output window, operand 0, single buffered']
    %6 = vsyncpa [#allocation3], 0
    %7 = vsyncpa [#allocation4], 0
    // Predicated region
    $region2: #{tpu_custom_call.1} parent=1 // pred_check
      _
    $region3: #{tpu_custom_call.1} parent=1 // pred_check_branch
      %9 = sbr.rel (0) target = $region5
    $region4: #{tpu_custom_call.1} parent=1 // pred_region
      %s11 = ssub.s32 1024, 1024
      %12 = vsyncadd [#allocation3], %s11
      %s14 = sshll.u32 [#allocation2], 4
      %s15 = int_to_ptr.vmem [resolvable:$true] %s14
      %17 = dma.hbm_to_vmem [thread:$0]  %s0, 1024, %s15, [#allocation3]
    $region5: #{tpu_custom_call.1} parent=1 // pred_fallthru
      _
    // Predicated region
    $region6: #{tpu_custom_call.1} parent=1 // pred_check
      _
    $region7: #{tpu_custom_call.1} parent=1 // pred_check_branch
      %19 = sbr.rel (0) target = $region9
    $region8: #{tpu_custom_call.1} parent=1 // pred_region
      %20 = dma.done [#allocation3], 1024
    $region9: #{tpu_custom_call.1} parent=1 // pred_fallthru
      _
    %v21 = vld [vmem:[#allocation2] sm:$0x3f]
    %v22 = vld [vmem:[#allocation2 + $0x8] sm:$0x3f]
    %v23 = vld [vmem:[#allocation2 + $0x10] sm:$0x3f]
    %v24 = vld [vmem:[#allocation2 + $0x18] sm:$0x3f]
    %v25 = vld [vmem:[#allocation2 + $0x20] sm:$0x3f]
    %v26 = vld [vmem:[#allocation2 + $0x28] sm:$0x3f]
    %v27 = vld [vmem:[#allocation2 + $0x30] sm:$0x3f]
    %v28 = vld [vmem:[#allocation2 + $0x38] sm:$0x3f]
    %29 = vst [vmem:[#allocation5] sm:$0x3f] %v21
    %30 = vst [vmem:[#allocation5 + $0x8] sm:$0x3f] %v22
    %31 = vst [vmem:[#allocation5 + $0x10] sm:$0x3f] %v23
    %32 = vst [vmem:[#allocation5 + $0x18] sm:$0x3f] %v24
    %33 = vst [vmem:[#allocation5 + $0x20] sm:$0x3f] %v25
    %34 = vst [vmem:[#allocation5 + $0x28] sm:$0x3f] %v26
    %35 = vst [vmem:[#allocation5 + $0x30] sm:$0x3f] %v27
    %36 = vst [vmem:[#allocation5 + $0x38] sm:$0x3f] %v28
    // Predicated region
    $region10: #{tpu_custom_call.1} parent=1 // pred_check
      _
    $region11: #{tpu_custom_call.1} parent=1 // pred_check_branch
      %38 = sbr.rel (0) target = $region13
    $region12: #{tpu_custom_call.1} parent=1 // pred_region
      %s40 = ssub.s32 1024, 1024
      %41 = vsyncadd [#allocation4], %s40
      %s43 = sshll.u32 [#allocation5], 4
      %s44 = int_to_ptr.vmem [resolvable:$true] %s43
      %46 = dma.vmem_to_hbm [thread:$0]  %s44, 1024, %s1, [#allocation4]
    $region13: #{tpu_custom_call.1} parent=1 // pred_fallthru
      _
    // Predicated region
    $region14: #{tpu_custom_call.1} parent=1 // pred_check
      _
    $region15: #{tpu_custom_call.1} parent=1 // pred_check_branch
      %48 = sbr.rel (0) target = $region17
    $region16: #{tpu_custom_call.1} parent=1 // pred_region
      %49 = dma.done [#allocation4], 1024
    $region17: #{tpu_custom_call.1} parent=1 // pred_fallthru
      _
    %50 = vsyncpa [#allocation3], 1
    %51 = vsyncpa [#allocation4], 1

</llo_original>
